<compile_context>
chip_gen: v7x
topology: tpu7x:2x2x1
jax: 0.10.0
libtpu: 0.0.40
codegen_flags: <defaults>
</compile_context>

<pallas_src>
import jax
import jax.numpy as jnp
from jax.experimental import pallas as pl
from jax.experimental.pallas import tpu as pltpu

_LANES = 128


def _mish_kernel(x_ref, o_ref):
    # Upcast to f32 for the transcendental math (needed on v5e, no-op for f32);
    # downcast on store so HBM traffic stays in the input dtype.
    x = x_ref[...].astype(jnp.float32)
    t = jnp.exp(jnp.minimum(x, 20.0))          # single EUP transcendental
    num = t * (t + 2.0)
    inv = pl.reciprocal(num + 2.0, approx=False)   # EUP, off the VALU
    o_ref[...] = (x * (num * inv)).astype(o_ref.dtype)


def _mish_jax(x):
    # Tail path (< 128 elements): kernel launch not worth it.
    xf = x.astype(jnp.float32)
    return (xf * jnp.tanh(jax.nn.softplus(xf))).astype(x.dtype)


def _dimension_semantics():
    # v7x has 2 TensorCores per chip; CORE_PARALLEL shards the grid across them.
    # Single-TC chips (v5e/v6e) get plain "parallel" (measured ~neutral there).
    try:
        kind = jax.devices()[0].device_kind.lower()
    except Exception:  # pragma: no cover - defensive
        kind = ""
    if "v7" in kind:
        try:
            return (pltpu.CORE_PARALLEL,)
        except AttributeError:
            pass
    return ("parallel",)


def _round_up(v, m):
    return ((v + m - 1) // m) * m


def _choose_block_rows(rows, max_block_rows):
    """Pick a block height: >= ~8 grid steps for pipelining / dual-TC, capped tiles."""
    if rows <= 32:
        # Tiny input: one full-extent block (always a legal block shape).
        return rows, 1
    target_steps = 8
    br = min(max_block_rows, max(8, _round_up(pl.cdiv(rows, target_steps), 8)))
    return br, pl.cdiv(rows, br)


def _mish_2d(x2d, max_block_rows):
    rows = x2d.shape[0]
    br, nblocks = _choose_block_rows(rows, max_block_rows)
    return pl.pallas_call(
        _mish_kernel,
        out_shape=jax.ShapeDtypeStruct((rows, _LANES), x2d.dtype),
        grid_spec=pltpu.PrefetchScalarGridSpec(
            num_scalar_prefetch=0,
            grid=(nblocks,),
            in_specs=[pl.BlockSpec((br, _LANES), lambda i: (i, 0))],
            out_specs=pl.BlockSpec((br, _LANES), lambda i: (i, 0)),
        ),
        compiler_params=pltpu.CompilerParams(
            dimension_semantics=_dimension_semantics(),
            vmem_limit_bytes=32 * 1024 * 1024,
        ),
    )(x2d)


def mish(x, *, max_block_rows=8192):
    """Elementwise Mish: x * tanh(softplus(x)). Matches the PyTorch module."""
    orig_shape = x.shape
    n = x.size
    if n == 0:
        return x

    flat = x.reshape(-1)
    rem = n % _LANES
    n_bulk = n - rem

    if rem == 0:
        # Common case (typical NCHW activations): fully lane-aligned, no extra passes.
        out_flat = _mish_2d(flat.reshape(n // _LANES, _LANES), max_block_rows).reshape(-1)
    elif n_bulk == 0:
        # Fewer than 128 elements total: plain JAX.
        out_flat = _mish_jax(flat)
    else:
        # Aligned bulk through the kernel, <128-element tail in plain JAX.
        # (Avoids the full-tensor pad + slice passes of the previous version.)
        bulk = flat[:n_bulk].reshape(n_bulk // _LANES, _LANES)
        out_bulk = _mish_2d(bulk, max_block_rows).reshape(-1)
        out_tail = _mish_jax(flat[n_bulk:])
        out_flat = jnp.concatenate([out_bulk, out_tail])

    return out_flat.reshape(orig_shape)


def _reference(x):
    return x * jnp.tanh(jax.nn.softplus(x))


if __name__ == "__main__":
    key = jax.random.PRNGKey(0)

    # Main check: NCHW activations (flat size is a multiple of 128 -> pure kernel path).
    x = jax.random.normal(key, (2, 4, 16, 16), dtype=jnp.float32)
    y = mish(x)
    jax.block_until_ready(y)
    y_ref = _reference(x)
    assert y.shape == x.shape and y.dtype == x.dtype
    assert jnp.allclose(y, y_ref, atol=1e-5, rtol=1e-4), float(
        jnp.max(jnp.abs(y - y_ref))
    )

    # Secondary check: non-128-multiple size exercises the bulk + tail path.
    x2 = jax.random.normal(jax.random.PRNGKey(1), (5, 100), dtype=jnp.float32)
    y2 = mish(x2)
    jax.block_until_ready(y2)
    assert y2.shape == x2.shape and y2.dtype == x2.dtype
    assert jnp.allclose(y2, _reference(x2), atol=1e-5, rtol=1e-4), float(
        jnp.max(jnp.abs(y2 - _reference(x2)))
    )

    print("KERNEL_OK")
</pallas_src>

<mosaic_0001>
module attributes {stable_mosaic.version = 11 : i64} {
  func.func @_mish_kernel(%arg0: i32, %arg1: memref<16x128xf32, #tpu.memory_space<vmem>>, %arg2: memref<16x128xf32, #tpu.memory_space<vmem>>) attributes {dimension_semantics = [#tpu.dimension_semantics<parallel>], iteration_bounds = array<i64: 1>, scalar_prefetch = 0 : i64, scratch_operands = 0 : i64, tpu.core_type = #tpu.core_type<tc>, window_params = [{transform_indices = @transform_0, window_bounds = array<i64: 16, 128>}, {transform_indices = @transform_1, window_bounds = array<i64: 16, 128>}]} {
    %c0 = arith.constant 0 : index
    %c0_0 = arith.constant 0 : index
    %0 = vector.load %arg1[%c0, %c0_0] : memref<16x128xf32, #tpu.memory_space<vmem>>, vector<16x128xf32>
    %cst = arith.constant 2.000000e+01 : f32
    %1 = vector.broadcast %cst : f32 to vector<16x128xf32>
    %2 = arith.minimumf %0, %1 : vector<16x128xf32>
    %3 = math.exp %2 : vector<16x128xf32>
    %cst_1 = arith.constant 2.000000e+00 : f32
    %4 = vector.broadcast %cst_1 : f32 to vector<16x128xf32>
    %5 = arith.addf %3, %4 : vector<16x128xf32>
    %6 = arith.mulf %3, %5 : vector<16x128xf32>
    %cst_2 = arith.constant 2.000000e+00 : f32
    %7 = vector.broadcast %cst_2 : f32 to vector<16x128xf32>
    %8 = arith.addf %6, %7 : vector<16x128xf32>
    %9 = tpu.reciprocal %8 : vector<16x128xf32> -> vector<16x128xf32>
    %10 = arith.mulf %6, %9 : vector<16x128xf32>
    %11 = arith.mulf %0, %10 : vector<16x128xf32>
    %c0_3 = arith.constant 0 : index
    %c0_4 = arith.constant 0 : index
    %12 = vector.load %arg2[%c0_3, %c0_4] : memref<16x128xf32, #tpu.memory_space<vmem>>, vector<16x128xf32>
    tpu.vector_store %arg2[%c0_3, %c0_4], %11 {strides = array<i32>} : memref<16x128xf32, #tpu.memory_space<vmem>>, vector<16x128xf32>,
    return
  }
  func.func @transform_0(%arg0: i32) -> (i32, i32) {
    %c0_i32 = arith.constant 0 : i32
    %c0_i32_0 = arith.constant 0 : i32
    return %arg0, %c0_i32 : i32, i32
  }
  func.func @transform_1(%arg0: i32) -> (i32, i32) {
    %c0_i32 = arith.constant 0 : i32
    %c0_i32_0 = arith.constant 0 : i32
    return %arg0, %c0_i32 : i32, i32
  }
}

</mosaic_0001>

<llo_original>
// kernel: tpu_custom_call.1
$region0: #{tpu_custom_call.1}
  #allocation0 [shape = 'u32[]', space=smem, size = 0x4, offset = 0x4, fixed_abs, tag = 'smem constant byte address 0x4 - core index']
  #allocation1 [shape = 'u32[144,128]{1,0:T(1,128)}', space=vmem, size = 0x12000, scoped, tag = 'internal scratch']
  %s0 = inlined_call_operand.hbm [shape: f32[16,128], index: 0, kind: input, shape index: {}]
  %s1 = inlined_call_operand.hbm [shape: f32[16,128], index: 1, kind: output, shape index: {}]
  %s2 = sld [smem:[#allocation0]]
  $region18: #{tpu_custom_call.1} parent=0
    _
  %s4 = ssub.s32 1, %s2
  %s5 = scalar_select 0, %s4, %s2
  $region1: #{tpu_custom_call.1} parent=0
    #allocation2 [shape = 'u8[8192]{0}', space=vmem, size = 0x2000, scoped, tag = 'input window, operand 0, single buffered']
    #allocation3 [shape = 's32[1]{0}', space=sflag, size = 0x4, scoped, tag = 'scoped memory for tpu_custom_call.1']
    #allocation4 [shape = 's32[1]{0}', space=sflag, size = 0x4, scoped, tag = 'scoped memory for tpu_custom_call.1']
    #allocation5 [shape = 'u8[8192]{0}', space=vmem, size = 0x2000, scoped, tag = 'output window, operand 0, single buffered']
    %6 = vsyncpa [#allocation3], 0
    %7 = vsyncpa [#allocation4], 0
    // Predicated region
    $region2: #{tpu_custom_call.1} parent=1 // pred_check
      _
    $region3: #{tpu_custom_call.1} parent=1 // pred_check_branch
      %9 = sbr.rel (0) target = $region5
    $region4: #{tpu_custom_call.1} parent=1 // pred_region
      %s11 = ssub.s32 256, 256
      %12 = vsyncadd [#allocation3], %s11
      %s13 = sshll.u32 [#allocation2], 4
      %s14 = int_to_ptr.vmem [resolvable:$true] %s13
      %19 = dma.hbm_to_vmem [thread:$0]  %s0, 256, %s14, [#allocation3], 128, 128, 8
    $region5: #{tpu_custom_call.1} parent=1 // pred_fallthru
      _
    // Predicated region
    $region6: #{tpu_custom_call.1} parent=1 // pred_check
      _
    $region7: #{tpu_custom_call.1} parent=1 // pred_check_branch
      %21 = sbr.rel (0) target = $region9
    $region8: #{tpu_custom_call.1} parent=1 // pred_region
      %22 = dma.done [#allocation3], 256
    $region9: #{tpu_custom_call.1} parent=1 // pred_fallthru
      _
    %v23 = vld [vmem:[#allocation2] sm:$0xff]
    %v24 = vld [vmem:[#allocation2 + $0x8] sm:$0xff]
    %v25 = vmin.f32 %v23, 20.0
    %v26 = vmin.f32 %v24, 20.0
    %v27 = vmul.f32 %v25, 1.442695
    %v28 = vpow.pop %v27
    %v29 = vmul.f32 %v26, 1.442695
    %v30 = vpow.pop %v29
    %v31 = vadd.f32 %v28, 2.0
    %v32 = vadd.f32 %v30, 2.0
    %v33 = vmul.f32 %v28, %v31
    %v34 = vmul.f32 %v30, %v32
    %v35 = vadd.f32 %v33, 2.0
    %v36 = vadd.f32 %v34, 2.0
    %v37 = vrcp.pop %v35
    %v38 = vrcp.pop %v36
    %v39 = vmul.f32 %v33, %v37
    %v40 = vmul.f32 %v34, %v38
    %v41 = vmul.f32 %v23, %v39
    %v42 = vmul.f32 %v24, %v40
    %43 = vst [vmem:[#allocation5] sm:$0xff] %v41
    %44 = vst [vmem:[#allocation5 + $0x8] sm:$0xff] %v42
    // Predicated region
    $region10: #{tpu_custom_call.1} parent=1 // pred_check
      _
    $region11: #{tpu_custom_call.1} parent=1 // pred_check_branch
      %46 = sbr.rel (0) target = $region13
    $region12: #{tpu_custom_call.1} parent=1 // pred_region
      %s48 = ssub.s32 256, 256
      %49 = vsyncadd [#allocation4], %s48
      %s50 = sshll.u32 [#allocation5], 4
      %s51 = int_to_ptr.vmem [resolvable:$true] %s50
      %56 = dma.vmem_to_hbm [thread:$0]  %s51, 256, %s1, [#allocation4], 128, 128, 8
    $region13: #{tpu_custom_call.1} parent=1 // pred_fallthru
      _
    // Predicated region
    $region14: #{tpu_custom_call.1} parent=1 // pred_check
      _
    $region15: #{tpu_custom_call.1} parent=1 // pred_check_branch
      %58 = sbr.rel (0) target = $region17
    $region16: #{tpu_custom_call.1} parent=1 // pred_region
      %59 = dma.done [#allocation4], 256
    $region17: #{tpu_custom_call.1} parent=1 // pred_fallthru
      _
    %60 = vsyncpa [#allocation3], 1
    %61 = vsyncpa [#allocation4], 1

</llo_original>
